<compile_context>
chip_gen: v5e
topology: v5e:2x2
jax: 0.10.0
libtpu: 0.0.40
codegen_flags: <defaults>
</compile_context>

<pallas_src>
import jax
import jax.numpy as jnp
from jax.experimental import pallas as pl
from jax.experimental.pallas import tpu as pltpu

GRAY_R, GRAY_G, GRAY_B = 0.299, 0.587, 0.114  # BT.601 luma (tensor_gray assumed)


def _ceil_div(a, b):
    return -(-a // b)


def _round_up8(v):
    return max(8, ((v + 7) // 8) * 8)


def _tpu_vmem_capacity():
    """Returns (vmem_capacity_bytes, query_succeeded).

    Falls back to the smallest per-core VMEM across current generations
    (v7x: 64 MiB) when the query is unavailable, so sizing is always safe.
    """
    try:
        info = pltpu.get_tpu_info()
        cap = int(getattr(info, "vmem_capacity_bytes", 0))
        if cap > 0:
            return cap, True
    except Exception:
        pass
    return 64 * 1024 * 1024, False


def _block_spec(block_shape, index_map, nbuf):
    """Input BlockSpec; requests deeper multi-buffering when nbuf > 2."""
    if nbuf > 2 and hasattr(pl, "Buffered"):
        try:
            return pl.BlockSpec(block_shape, index_map,
                                pipeline_mode=pl.Buffered(nbuf))
        except TypeError:  # older pallas without pipeline_mode kwarg
            pass
    return pl.BlockSpec(block_shape, index_map)


def _choose_tiles(batch, n_rows, stage, bytes_per_row, input_budget, nbuf):
    """Pick (batch_tile, row_tile) under the per-generation VMEM input budget.

    bytes_per_row = bytes of ALL inputs for one (batch=1, lane-row=1) slice.
    """
    cap_rows = max(8, int(input_budget // (nbuf * bytes_per_row)))

    # Batch block: largest divisor of `batch` that still leaves room for a
    # reasonably sized row tile (>= min(R, 256) rows), so large batches don't
    # force the row tile below the efficient range (or into a giant tile).
    tr_floor = max(1, min(n_rows, 256))
    tb_max = max(1, min(batch, cap_rows // tr_floor))
    tb = 1
    for d in range(tb_max, 0, -1):
        if batch % d == 0:
            tb = d
            break

    if n_rows <= 8:
        # Tiny spatial extent: row tile is the full (sub-8) row dim.  Still
        # try to expose a few grid steps over the batch axis for pipelining /
        # the second TensorCore on v7x.
        want_b_tiles = min(4, batch)
        tb_cap = max(1, batch // want_b_tiles)
        tb2 = 1
        for d in range(min(tb, tb_cap), 0, -1):
            if batch % d == 0:
                tb2 = d
                break
        return tb2, n_rows

    b_tiles = batch // tb

    # Row tile: as big as the budget allows (multiple of 8) ...
    tr = min(n_rows, max(8, (cap_rows // tb // 8) * 8))

    # ... but guarantee >= ~4 total grid steps so v7x's second TensorCore is
    # fed and DMA/compute overlap doesn't degenerate to a single step.
    target_steps = 4
    if b_tiles * _ceil_div(n_rows, tr) < target_steps:
        wanted_row_tiles = _ceil_div(target_steps, b_tiles)
        tr = min(tr, _round_up8(_ceil_div(n_rows, wanted_row_tiles)))
        tr = max(8, tr)
    return tb, tr


def _make_kernel(stage, scale_tx, scale_mse, n_rows, tr, ragged):
    def _reduce_to_8x128(v):
        """(tb, tr, 128) f32 -> (8, 128) partial sums (VPU adds only when
        tr % 8 == 0; tiny-shape fallback does a full reduce into row 0)."""
        tb, trows = v.shape[0], v.shape[1]
        if trows % 8 == 0:
            return v.reshape(tb * trows // 8, 8, 128).sum(axis=0)
        row = jnp.sum(jnp.sum(v, axis=0), axis=0, keepdims=True)      # (1,128)
        i8 = jax.lax.broadcasted_iota(jnp.int32, (8, 128), 0)
        return jnp.where(i8 == 0, row, jnp.zeros((8, 128), v.dtype))

    def kernel(*refs):
        x_refs = refs[:stage]             # each (tb, tr, 128)
        img_refs = refs[stage:2 * stage]  # each (tb, 3, tr, 128)
        out_ref = refs[2 * stage]         # (1, 1, 8, 128)

        if ragged:
            r_idx = pl.program_id(1)
            rows = jax.lax.broadcasted_iota(jnp.int32, (tr, 128), 0)
            row_mask = ((r_idx * tr + rows) < n_rows)[None]   # (1, tr, 128)

        acc_tx = jnp.zeros((8, 128), jnp.float32)   # sum of (t_i - x_i)
        acc_d2 = jnp.zeros((8, 128), jnp.float32)   # sum of (img_i - img_{i+1})^2
        prev = None
        for i in range(stage):
            x = x_refs[i][...].astype(jnp.float32)        # (tb, tr, 128)
            img = img_refs[i][...].astype(jnp.float32)    # (tb, 3, tr, 128)
            c0, c1, c2 = img[:, 0], img[:, 1], img[:, 2]  # (tb, tr, 128) each

            # 0.2 * sum_i mean(t_i - x_i) term (the +0.2*stage constant is
            # added outside the kernel).
            gray = GRAY_R * c0 + GRAY_G * c1 + GRAY_B * c2
            t = (jnp.exp(1.5 * x) - 2.0) * (jnp.exp(1.5 * gray) - 2.0) + 1.0
            t = jnp.clip(t, 0.0, 5.0)
            term = t - x
            if ragged:
                term = jnp.where(row_mask, term, 0.0)
            acc_tx = acc_tx + _reduce_to_8x128(term)

            # 2 * sum_i MSE(img_i, img_{i+1}) fused into the same loop: the
            # previous stage's channel planes are still live in vregs/VMEM.
            if prev is not None:
                p0, p1, p2 = prev
                d0, d1, d2 = p0 - c0, p1 - c1, p2 - c2
                s = d0 * d0 + d1 * d1 + d2 * d2
                if ragged:
                    s = jnp.where(row_mask, s, 0.0)
                acc_d2 = acc_d2 + _reduce_to_8x128(s)
            prev = (c0, c1, c2)

        partial = scale_tx * acc_tx
        if stage > 1:
            partial = partial + scale_mse * acc_d2
        out_ref[...] = partial[None, None]     # full unmasked (8,128) store

    return kernel


def exposure_loss_pallas(x_list, img_list, stage=3):
    """x_list[i]: (B, 1, H, W); img_list[i]: (B, 3, H, W)."""
    B, _, H, W = x_list[0].shape
    hw = H * W
    assert hw % 128 == 0, "H*W must be a multiple of 128 for the lane-dense layout"
    # TODO(synk): pad/mask the flattened spatial axis to support H*W % 128 != 0.
    R = hw // 128

    # Free (contiguous) reshapes into the lane-dense layout.  Keep the
    # caller's dtype; widen to f32 in-register inside the kernel (no extra
    # HBM astype pass for bf16/fp16 callers).
    xs = [x_list[i].reshape(B, R, 128) for i in range(stage)]
    imgs = [img_list[i].reshape(B, 3, R, 128) for i in range(stage)]

    # Generation-aware VMEM budgeting.
    vmem_cap, cap_known = _tpu_vmem_capacity()
    vmem_limit = int(vmem_cap * 3 // 4)        # ~96 MiB v5e/v6e, ~48 MiB v7x
    input_budget = vmem_limit // 2             # rest: temporaries + Mosaic scratch
    # Deeper input pipelining on v7x-class parts (faster HBM, 64 MiB VMEM/TC).
    nbuf = 3 if (cap_known and vmem_cap <= 64 * 1024 * 1024) else 2

    x_item = jnp.dtype(xs[0].dtype).itemsize
    img_item = jnp.dtype(imgs[0].dtype).itemsize
    bytes_per_row = stage * 128 * (x_item + 3 * img_item)

    tb, tr = _choose_tiles(B, R, stage, bytes_per_row, input_budget, nbuf)
    b_tiles = B // tb
    n_row_tiles = _ceil_div(R, tr)
    ragged = (R % tr) != 0

    n_x = float(B * H * W)          # numel of x_i (and of the clamped product)
    n_img = float(B * 3 * H * W)    # numel of img_i (MSE denominator)
    scale_tx = 0.2 / n_x
    scale_mse = 2.0 / n_img

    x_spec = _block_spec((tb, tr, 128), lambda b, r: (b, r, 0), nbuf)
    img_spec = _block_spec((tb, 3, tr, 128), lambda b, r: (b, 0, r, 0), nbuf)

    partials = pl.pallas_call(
        _make_kernel(stage, scale_tx, scale_mse, R, tr, ragged),
        out_shape=jax.ShapeDtypeStruct((b_tiles, n_row_tiles, 8, 128), jnp.float32),
        grid=(b_tiles, n_row_tiles),
        in_specs=[x_spec] * stage + [img_spec] * stage,
        out_specs=pl.BlockSpec((1, 1, 8, 128), lambda b, r: (b, r, 0, 0)),
        compiler_params=pltpu.CompilerParams(
            dimension_semantics=("parallel", "parallel"),
            vmem_limit_bytes=vmem_limit),
    )(*xs, *imgs)

    # Tiny final reduction + constant term outside the kernel.
    return 0.2 * stage + jnp.sum(partials)


def exposure_loss_ref(x_list, img_list, stage=3):
    """Pure-JAX reference mirroring the PyTorch module."""
    loss_xsize = 0.0
    loss_ximg = 0.0
    loss_img = 0.0
    for i in range(stage):
        loss_xsize = loss_xsize + (1.0 - jnp.mean(x_list[i]))
        im = img_list[i]
        gray = GRAY_R * im[:, 0] + GRAY_G * im[:, 1] + GRAY_B * im[:, 2]
        gray = gray[:, None]                                   # (B, 1, H, W)
        t = (jnp.exp(1.5 * x_list[i]) - 2.0) * (jnp.exp(1.5 * gray) - 2.0) + 1.0
        t = jnp.clip(t, 0.0, 5.0)
        loss_ximg = loss_ximg + jnp.mean(t)
    for i in range(stage - 1):
        loss_img = loss_img + jnp.mean((img_list[i] - img_list[i + 1]) ** 2)
    return 0.2 * loss_xsize + 0.2 * loss_ximg + 2.0 * loss_img


if __name__ == "__main__":
    key = jax.random.PRNGKey(0)
    B, H, W = 2, 16, 16
    stage = 3
    keys = jax.random.split(key, 2 * stage)
    x_list = [jax.random.uniform(keys[i], (B, 1, H, W), dtype=jnp.float32)
              for i in range(stage)]
    img_list = [jax.random.uniform(keys[stage + i], (B, 3, H, W), dtype=jnp.float32)
                for i in range(stage)]

    loss = exposure_loss_pallas(x_list, img_list, stage=stage)
    loss = jax.block_until_ready(loss)

    ref = exposure_loss_ref(x_list, img_list, stage=stage)
    assert jnp.allclose(loss, ref, atol=1e-4, rtol=1e-4), (float(loss), float(ref))

    print("KERNEL_OK")
</pallas_src>

<mosaic_0001>
module attributes {stable_mosaic.version = 11 : i64} {
  func.func @kernel(%arg0: i32, %arg1: i32, %arg2: memref<1x2x128xf32, #tpu.memory_space<vmem>>, %arg3: memref<1x2x128xf32, #tpu.memory_space<vmem>>, %arg4: memref<1x2x128xf32, #tpu.memory_space<vmem>>, %arg5: memref<1x3x2x128xf32, #tpu.memory_space<vmem>>, %arg6: memref<1x3x2x128xf32, #tpu.memory_space<vmem>>, %arg7: memref<1x3x2x128xf32, #tpu.memory_space<vmem>>, %arg8: memref<1x1x8x128xf32, #tpu.memory_space<vmem>>) attributes {dimension_semantics = [#tpu.dimension_semantics<parallel>, #tpu.dimension_semantics<parallel>], iteration_bounds = array<i64: 2, 1>, scalar_prefetch = 0 : i64, scratch_operands = 0 : i64, tpu.core_type = #tpu.core_type<tc>, window_params = [{transform_indices = @transform_0, window_bounds = array<i64: 1, 2, 128>}, {transform_indices = @transform_1, window_bounds = array<i64: 1, 2, 128>}, {transform_indices = @transform_2, window_bounds = array<i64: 1, 2, 128>}, {transform_indices = @transform_3, window_bounds = array<i64: 1, 3, 2, 128>}, {transform_indices = @transform_4, window_bounds = array<i64: 1, 3, 2, 128>}, {transform_indices = @transform_5, window_bounds = array<i64: 1, 3, 2, 128>}, {transform_indices = @transform_6, window_bounds = array<i64: 1, 1, 8, 128>}]} {
    %cst = arith.constant 0.000000e+00 : f32
    %0 = vector.broadcast %cst : f32 to vector<8x128xf32>
    %cst_0 = arith.constant 0.000000e+00 : f32
    %1 = vector.broadcast %cst_0 : f32 to vector<8x128xf32>
    %c0 = arith.constant 0 : index
    %c0_1 = arith.constant 0 : index
    %c0_2 = arith.constant 0 : index
    %2 = vector.load %arg2[%c0, %c0_1, %c0_2] : memref<1x2x128xf32, #tpu.memory_space<vmem>>, vector<1x2x128xf32>
    %c0_3 = arith.constant 0 : index
    %c0_4 = arith.constant 0 : index
    %c0_5 = arith.constant 0 : index
    %c0_6 = arith.constant 0 : index
    %3 = vector.load %arg5[%c0_3, %c0_4, %c0_5, %c0_6] : memref<1x3x2x128xf32, #tpu.memory_space<vmem>>, vector<1x3x2x128xf32>
    %4 = vector.extract_strided_slice %3 {offsets = [0, 0, 0, 0], sizes = [1, 1, 2, 128], strides = [1, 1, 1, 1]} : vector<1x3x2x128xf32> to vector<1x1x2x128xf32>
    %5 = vector.shape_cast %4 : vector<1x1x2x128xf32> to vector<1x2x128xf32>
    %6 = vector.extract_strided_slice %3 {offsets = [0, 1, 0, 0], sizes = [1, 1, 2, 128], strides = [1, 1, 1, 1]} : vector<1x3x2x128xf32> to vector<1x1x2x128xf32>
    %7 = vector.shape_cast %6 : vector<1x1x2x128xf32> to vector<1x2x128xf32>
    %8 = vector.extract_strided_slice %3 {offsets = [0, 2, 0, 0], sizes = [1, 1, 2, 128], strides = [1, 1, 1, 1]} : vector<1x3x2x128xf32> to vector<1x1x2x128xf32>
    %9 = vector.shape_cast %8 : vector<1x1x2x128xf32> to vector<1x2x128xf32>
    %cst_7 = arith.constant 2.990000e-01 : f32
    %10 = vector.broadcast %cst_7 : f32 to vector<1x2x128xf32>
    %11 = arith.mulf %10, %5 : vector<1x2x128xf32>
    %cst_8 = arith.constant 5.870000e-01 : f32
    %12 = vector.broadcast %cst_8 : f32 to vector<1x2x128xf32>
    %13 = arith.mulf %12, %7 : vector<1x2x128xf32>
    %14 = arith.addf %11, %13 : vector<1x2x128xf32>
    %cst_9 = arith.constant 1.140000e-01 : f32
    %15 = vector.broadcast %cst_9 : f32 to vector<1x2x128xf32>
    %16 = arith.mulf %15, %9 : vector<1x2x128xf32>
    %17 = arith.addf %14, %16 : vector<1x2x128xf32>
    %cst_10 = arith.constant 1.500000e+00 : f32
    %18 = vector.broadcast %cst_10 : f32 to vector<1x2x128xf32>
    %19 = arith.mulf %18, %2 : vector<1x2x128xf32>
    %20 = math.exp %19 : vector<1x2x128xf32>
    %cst_11 = arith.constant 2.000000e+00 : f32
    %21 = vector.broadcast %cst_11 : f32 to vector<1x2x128xf32>
    %22 = arith.subf %20, %21 : vector<1x2x128xf32>
    %cst_12 = arith.constant 1.500000e+00 : f32
    %23 = vector.broadcast %cst_12 : f32 to vector<1x2x128xf32>
    %24 = arith.mulf %23, %17 : vector<1x2x128xf32>
    %25 = math.exp %24 : vector<1x2x128xf32>
    %cst_13 = arith.constant 2.000000e+00 : f32
    %26 = vector.broadcast %cst_13 : f32 to vector<1x2x128xf32>
    %27 = arith.subf %25, %26 : vector<1x2x128xf32>
    %28 = arith.mulf %22, %27 : vector<1x2x128xf32>
    %cst_14 = arith.constant 1.000000e+00 : f32
    %29 = vector.broadcast %cst_14 : f32 to vector<1x2x128xf32>
    %30 = arith.addf %28, %29 : vector<1x2x128xf32>
    %cst_15 = arith.constant 0.000000e+00 : f32
    %cst_16 = arith.constant 5.000000e+00 : f32
    %31 = vector.broadcast %cst_15 : f32 to vector<1x2x128xf32>
    %32 = arith.maximumf %31, %30 : vector<1x2x128xf32>
    %33 = vector.broadcast %cst_16 : f32 to vector<1x2x128xf32>
    %34 = arith.minimumf %33, %32 : vector<1x2x128xf32>
    %35 = arith.subf %34, %2 : vector<1x2x128xf32>
    %cst_17 = arith.constant dense<0.000000e+00> : vector<2x128xf32>
    %36 = vector.multi_reduction <add>, %35, %cst_17 [0] : vector<1x2x128xf32> to vector<2x128xf32>
    %cst_18 = arith.constant dense<0.000000e+00> : vector<128xf32>
    %37 = vector.multi_reduction <add>, %36, %cst_18 [0] : vector<2x128xf32> to vector<128xf32>
    %38 = vector.shape_cast %37 : vector<128xf32> to vector<1x128xf32>
    %39 = tpu.iota {dimensions = array<i32: 0>} : vector<8x128xi32>
    %c0_i32 = arith.constant 0 : i32
    %40 = vector.broadcast %c0_i32 : i32 to vector<8x128xi32>
    %41 = arith.cmpi eq, %39, %40 : vector<8x128xi32>
    %cst_19 = arith.constant 0.000000e+00 : f32
    %42 = vector.broadcast %cst_19 : f32 to vector<8x128xf32>
    %43 = vector.shape_cast %38 : vector<1x128xf32> to vector<1x128xf32>
    %44 = vector.broadcast %43 : vector<1x128xf32> to vector<8x128xf32>
    %45 = arith.select %41, %44, %42 : vector<8x128xi1>, vector<8x128xf32>
    %46 = arith.addf %0, %45 : vector<8x128xf32>
    %c0_20 = arith.constant 0 : index
    %c0_21 = arith.constant 0 : index
    %c0_22 = arith.constant 0 : index
    %47 = vector.load %arg3[%c0_20, %c0_21, %c0_22] : memref<1x2x128xf32, #tpu.memory_space<vmem>>, vector<1x2x128xf32>
    %c0_23 = arith.constant 0 : index
    %c0_24 = arith.constant 0 : index
    %c0_25 = arith.constant 0 : index
    %c0_26 = arith.constant 0 : index
    %48 = vector.load %arg6[%c0_23, %c0_24, %c0_25, %c0_26] : memref<1x3x2x128xf32, #tpu.memory_space<vmem>>, vector<1x3x2x128xf32>
    %49 = vector.extract_strided_slice %48 {offsets = [0, 0, 0, 0], sizes = [1, 1, 2, 128], strides = [1, 1, 1, 1]} : vector<1x3x2x128xf32> to vector<1x1x2x128xf32>
    %50 = vector.shape_cast %49 : vector<1x1x2x128xf32> to vector<1x2x128xf32>
    %51 = vector.extract_strided_slice %48 {offsets = [0, 1, 0, 0], sizes = [1, 1, 2, 128], strides = [1, 1, 1, 1]} : vector<1x3x2x128xf32> to vector<1x1x2x128xf32>
    %52 = vector.shape_cast %51 : vector<1x1x2x128xf32> to vector<1x2x128xf32>
    %53 = vector.extract_strided_slice %48 {offsets = [0, 2, 0, 0], sizes = [1, 1, 2, 128], strides = [1, 1, 1, 1]} : vector<1x3x2x128xf32> to vector<1x1x2x128xf32>
    %54 = vector.shape_cast %53 : vector<1x1x2x128xf32> to vector<1x2x128xf32>
    %cst_27 = arith.constant 2.990000e-01 : f32
    %55 = vector.broadcast %cst_27 : f32 to vector<1x2x128xf32>
    %56 = arith.mulf %55, %50 : vector<1x2x128xf32>
    %cst_28 = arith.constant 5.870000e-01 : f32
    %57 = vector.broadcast %cst_28 : f32 to vector<1x2x128xf32>
    %58 = arith.mulf %57, %52 : vector<1x2x128xf32>
    %59 = arith.addf %56, %58 : vector<1x2x128xf32>
    %cst_29 = arith.constant 1.140000e-01 : f32
    %60 = vector.broadcast %cst_29 : f32 to vector<1x2x128xf32>
    %61 = arith.mulf %60, %54 : vector<1x2x128xf32>
    %62 = arith.addf %59, %61 : vector<1x2x128xf32>
    %cst_30 = arith.constant 1.500000e+00 : f32
    %63 = vector.broadcast %cst_30 : f32 to vector<1x2x128xf32>
    %64 = arith.mulf %63, %47 : vector<1x2x128xf32>
    %65 = math.exp %64 : vector<1x2x128xf32>
    %cst_31 = arith.constant 2.000000e+00 : f32
    %66 = vector.broadcast %cst_31 : f32 to vector<1x2x128xf32>
    %67 = arith.subf %65, %66 : vector<1x2x128xf32>
    %cst_32 = arith.constant 1.500000e+00 : f32
    %68 = vector.broadcast %cst_32 : f32 to vector<1x2x128xf32>
    %69 = arith.mulf %68, %62 : vector<1x2x128xf32>
    %70 = math.exp %69 : vector<1x2x128xf32>
    %cst_33 = arith.constant 2.000000e+00 : f32
    %71 = vector.broadcast %cst_33 : f32 to vector<1x2x128xf32>
    %72 = arith.subf %70, %71 : vector<1x2x128xf32>
    %73 = arith.mulf %67, %72 : vector<1x2x128xf32>
    %cst_34 = arith.constant 1.000000e+00 : f32
    %74 = vector.broadcast %cst_34 : f32 to vector<1x2x128xf32>
    %75 = arith.addf %73, %74 : vector<1x2x128xf32>
    %cst_35 = arith.constant 0.000000e+00 : f32
    %cst_36 = arith.constant 5.000000e+00 : f32
    %76 = vector.broadcast %cst_35 : f32 to vector<1x2x128xf32>
    %77 = arith.maximumf %76, %75 : vector<1x2x128xf32>
    %78 = vector.broadcast %cst_36 : f32 to vector<1x2x128xf32>
    %79 = arith.minimumf %78, %77 : vector<1x2x128xf32>
    %80 = arith.subf %79, %47 : vector<1x2x128xf32>
    %cst_37 = arith.constant dense<0.000000e+00> : vector<2x128xf32>
    %81 = vector.multi_reduction <add>, %80, %cst_37 [0] : vector<1x2x128xf32> to vector<2x128xf32>
    %cst_38 = arith.constant dense<0.000000e+00> : vector<128xf32>
    %82 = vector.multi_reduction <add>, %81, %cst_38 [0] : vector<2x128xf32> to vector<128xf32>
    %83 = vector.shape_cast %82 : vector<128xf32> to vector<1x128xf32>
    %84 = tpu.iota {dimensions = array<i32: 0>} : vector<8x128xi32>
    %c0_i32_39 = arith.constant 0 : i32
    %85 = vector.broadcast %c0_i32_39 : i32 to vector<8x128xi32>
    %86 = arith.cmpi eq, %84, %85 : vector<8x128xi32>
    %cst_40 = arith.constant 0.000000e+00 : f32
    %87 = vector.broadcast %cst_40 : f32 to vector<8x128xf32>
    %88 = vector.shape_cast %83 : vector<1x128xf32> to vector<1x128xf32>
    %89 = vector.broadcast %88 : vector<1x128xf32> to vector<8x128xf32>
    %90 = arith.select %86, %89, %87 : vector<8x128xi1>, vector<8x128xf32>
    %91 = arith.addf %46, %90 : vector<8x128xf32>
    %92 = arith.subf %5, %50 : vector<1x2x128xf32>
    %93 = arith.subf %7, %52 : vector<1x2x128xf32>
    %94 = arith.subf %9, %54 : vector<1x2x128xf32>
    %95 = arith.mulf %92, %92 : vector<1x2x128xf32>
    %96 = arith.mulf %93, %93 : vector<1x2x128xf32>
    %97 = arith.addf %95, %96 : vector<1x2x128xf32>
    %98 = arith.mulf %94, %94 : vector<1x2x128xf32>
    %99 = arith.addf %97, %98 : vector<1x2x128xf32>
    %cst_41 = arith.constant dense<0.000000e+00> : vector<2x128xf32>
    %100 = vector.multi_reduction <add>, %99, %cst_41 [0] : vector<1x2x128xf32> to vector<2x128xf32>
    %cst_42 = arith.constant dense<0.000000e+00> : vector<128xf32>
    %101 = vector.multi_reduction <add>, %100, %cst_42 [0] : vector<2x128xf32> to vector<128xf32>
    %102 = vector.shape_cast %101 : vector<128xf32> to vector<1x128xf32>
    %103 = tpu.iota {dimensions = array<i32: 0>} : vector<8x128xi32>
    %c0_i32_43 = arith.constant 0 : i32
    %104 = vector.broadcast %c0_i32_43 : i32 to vector<8x128xi32>
    %105 = arith.cmpi eq, %103, %104 : vector<8x128xi32>
    %cst_44 = arith.constant 0.000000e+00 : f32
    %106 = vector.broadcast %cst_44 : f32 to vector<8x128xf32>
    %107 = vector.shape_cast %102 : vector<1x128xf32> to vector<1x128xf32>
    %108 = vector.broadcast %107 : vector<1x128xf32> to vector<8x128xf32>
    %109 = arith.select %105, %108, %106 : vector<8x128xi1>, vector<8x128xf32>
    %110 = arith.addf %1, %109 : vector<8x128xf32>
    %c0_45 = arith.constant 0 : index
    %c0_46 = arith.constant 0 : index
    %c0_47 = arith.constant 0 : index
    %111 = vector.load %arg4[%c0_45, %c0_46, %c0_47] : memref<1x2x128xf32, #tpu.memory_space<vmem>>, vector<1x2x128xf32>
    %c0_48 = arith.constant 0 : index
    %c0_49 = arith.constant 0 : index
    %c0_50 = arith.constant 0 : index
    %c0_51 = arith.constant 0 : index
    %112 = vector.load %arg7[%c0_48, %c0_49, %c0_50, %c0_51] : memref<1x3x2x128xf32, #tpu.memory_space<vmem>>, vector<1x3x2x128xf32>
    %113 = vector.extract_strided_slice %112 {offsets = [0, 0, 0, 0], sizes = [1, 1, 2, 128], strides = [1, 1, 1, 1]} : vector<1x3x2x128xf32> to vector<1x1x2x128xf32>
    %114 = vector.shape_cast %113 : vector<1x1x2x128xf32> to vector<1x2x128xf32>
    %115 = vector.extract_strided_slice %112 {offsets = [0, 1, 0, 0], sizes = [1, 1, 2, 128], strides = [1, 1, 1, 1]} : vector<1x3x2x128xf32> to vector<1x1x2x128xf32>
    %116 = vector.shape_cast %115 : vector<1x1x2x128xf32> to vector<1x2x128xf32>
    %117 = vector.extract_strided_slice %112 {offsets = [0, 2, 0, 0], sizes = [1, 1, 2, 128], strides = [1, 1, 1, 1]} : vector<1x3x2x128xf32> to vector<1x1x2x128xf32>
    %118 = vector.shape_cast %117 : vector<1x1x2x128xf32> to vector<1x2x128xf32>
    %cst_52 = arith.constant 2.990000e-01 : f32
    %119 = vector.broadcast %cst_52 : f32 to vector<1x2x128xf32>
    %120 = arith.mulf %119, %114 : vector<1x2x128xf32>
    %cst_53 = arith.constant 5.870000e-01 : f32
    %121 = vector.broadcast %cst_53 : f32 to vector<1x2x128xf32>
    %122 = arith.mulf %121, %116 : vector<1x2x128xf32>
    %123 = arith.addf %120, %122 : vector<1x2x128xf32>
    %cst_54 = arith.constant 1.140000e-01 : f32
    %124 = vector.broadcast %cst_54 : f32 to vector<1x2x128xf32>
    %125 = arith.mulf %124, %118 : vector<1x2x128xf32>
    %126 = arith.addf %123, %125 : vector<1x2x128xf32>
    %cst_55 = arith.constant 1.500000e+00 : f32
    %127 = vector.broadcast %cst_55 : f32 to vector<1x2x128xf32>
    %128 = arith.mulf %127, %111 : vector<1x2x128xf32>
    %129 = math.exp %128 : vector<1x2x128xf32>
    %cst_56 = arith.constant 2.000000e+00 : f32
    %130 = vector.broadcast %cst_56 : f32 to vector<1x2x128xf32>
    %131 = arith.subf %129, %130 : vector<1x2x128xf32>
    %cst_57 = arith.constant 1.500000e+00 : f32
    %132 = vector.broadcast %cst_57 : f32 to vector<1x2x128xf32>
    %133 = arith.mulf %132, %126 : vector<1x2x128xf32>
    %134 = math.exp %133 : vector<1x2x128xf32>
    %cst_58 = arith.constant 2.000000e+00 : f32
    %135 = vector.broadcast %cst_58 : f32 to vector<1x2x128xf32>
    %136 = arith.subf %134, %135 : vector<1x2x128xf32>
    %137 = arith.mulf %131, %136 : vector<1x2x128xf32>
    %cst_59 = arith.constant 1.000000e+00 : f32
    %138 = vector.broadcast %cst_59 : f32 to vector<1x2x128xf32>
    %139 = arith.addf %137, %138 : vector<1x2x128xf32>
    %cst_60 = arith.constant 0.000000e+00 : f32
    %cst_61 = arith.constant 5.000000e+00 : f32
    %140 = vector.broadcast %cst_60 : f32 to vector<1x2x128xf32>
    %141 = arith.maximumf %140, %139 : vector<1x2x128xf32>
    %142 = vector.broadcast %cst_61 : f32 to vector<1x2x128xf32>
    %143 = arith.minimumf %142, %141 : vector<1x2x128xf32>
    %144 = arith.subf %143, %111 : vector<1x2x128xf32>
    %cst_62 = arith.constant dense<0.000000e+00> : vector<2x128xf32>
    %145 = vector.multi_reduction <add>, %144, %cst_62 [0] : vector<1x2x128xf32> to vector<2x128xf32>
    %cst_63 = arith.constant dense<0.000000e+00> : vector<128xf32>
    %146 = vector.multi_reduction <add>, %145, %cst_63 [0] : vector<2x128xf32> to vector<128xf32>
    %147 = vector.shape_cast %146 : vector<128xf32> to vector<1x128xf32>
    %148 = tpu.iota {dimensions = array<i32: 0>} : vector<8x128xi32>
    %c0_i32_64 = arith.constant 0 : i32
    %149 = vector.broadcast %c0_i32_64 : i32 to vector<8x128xi32>
    %150 = arith.cmpi eq, %148, %149 : vector<8x128xi32>
    %cst_65 = arith.constant 0.000000e+00 : f32
    %151 = vector.broadcast %cst_65 : f32 to vector<8x128xf32>
    %152 = vector.shape_cast %147 : vector<1x128xf32> to vector<1x128xf32>
    %153 = vector.broadcast %152 : vector<1x128xf32> to vector<8x128xf32>
    %154 = arith.select %150, %153, %151 : vector<8x128xi1>, vector<8x128xf32>
    %155 = arith.addf %91, %154 : vector<8x128xf32>
    %156 = arith.subf %50, %114 : vector<1x2x128xf32>
    %157 = arith.subf %52, %116 : vector<1x2x128xf32>
    %158 = arith.subf %54, %118 : vector<1x2x128xf32>
    %159 = arith.mulf %156, %156 : vector<1x2x128xf32>
    %160 = arith.mulf %157, %157 : vector<1x2x128xf32>
    %161 = arith.addf %159, %160 : vector<1x2x128xf32>
    %162 = arith.mulf %158, %158 : vector<1x2x128xf32>
    %163 = arith.addf %161, %162 : vector<1x2x128xf32>
    %cst_66 = arith.constant dense<0.000000e+00> : vector<2x128xf32>
    %164 = vector.multi_reduction <add>, %163, %cst_66 [0] : vector<1x2x128xf32> to vector<2x128xf32>
    %cst_67 = arith.constant dense<0.000000e+00> : vector<128xf32>
    %165 = vector.multi_reduction <add>, %164, %cst_67 [0] : vector<2x128xf32> to vector<128xf32>
    %166 = vector.shape_cast %165 : vector<128xf32> to vector<1x128xf32>
    %167 = tpu.iota {dimensions = array<i32: 0>} : vector<8x128xi32>
    %c0_i32_68 = arith.constant 0 : i32
    %168 = vector.broadcast %c0_i32_68 : i32 to vector<8x128xi32>
    %169 = arith.cmpi eq, %167, %168 : vector<8x128xi32>
    %cst_69 = arith.constant 0.000000e+00 : f32
    %170 = vector.broadcast %cst_69 : f32 to vector<8x128xf32>
    %171 = vector.shape_cast %166 : vector<1x128xf32> to vector<1x128xf32>
    %172 = vector.broadcast %171 : vector<1x128xf32> to vector<8x128xf32>
    %173 = arith.select %169, %172, %170 : vector<8x128xi1>, vector<8x128xf32>
    %174 = arith.addf %110, %173 : vector<8x128xf32>
    %cst_70 = arith.constant 3.906250e-04 : f32
    %175 = vector.broadcast %cst_70 : f32 to vector<8x128xf32>
    %176 = arith.mulf %175, %155 : vector<8x128xf32>
    %cst_71 = arith.constant 0.00130208337 : f32
    %177 = vector.broadcast %cst_71 : f32 to vector<8x128xf32>
    %178 = arith.mulf %177, %174 : vector<8x128xf32>
    %179 = arith.addf %176, %178 : vector<8x128xf32>
    %180 = vector.shape_cast %179 : vector<8x128xf32> to vector<1x1x8x128xf32>
    %c0_72 = arith.constant 0 : index
    %c0_73 = arith.constant 0 : index
    %c0_74 = arith.constant 0 : index
    %c0_75 = arith.constant 0 : index
    %181 = vector.load %arg8[%c0_72, %c0_73, %c0_74, %c0_75] : memref<1x1x8x128xf32, #tpu.memory_space<vmem>>, vector<1x1x8x128xf32>
    tpu.vector_store %arg8[%c0_72, %c0_73, %c0_74, %c0_75], %180 {strides = array<i32>} : memref<1x1x8x128xf32, #tpu.memory_space<vmem>>, vector<1x1x8x128xf32>,
    return
  }
  func.func @transform_0(%arg0: i32, %arg1: i32) -> (i32, i32, i32) {
    %c0_i32 = arith.constant 0 : i32
    %c0_i32_0 = arith.constant 0 : i32
    return %arg0, %arg1, %c0_i32 : i32, i32, i32
  }
  func.func @transform_1(%arg0: i32, %arg1: i32) -> (i32, i32, i32) {
    %c0_i32 = arith.constant 0 : i32
    %c0_i32_0 = arith.constant 0 : i32
    return %arg0, %arg1, %c0_i32 : i32, i32, i32
  }
  func.func @transform_2(%arg0: i32, %arg1: i32) -> (i32, i32, i32) {
    %c0_i32 = arith.constant 0 : i32
    %c0_i32_0 = arith.constant 0 : i32
    return %arg0, %arg1, %c0_i32 : i32, i32, i32
  }
  func.func @transform_3(%arg0: i32, %arg1: i32) -> (i32, i32, i32, i32) {
    %c0_i32 = arith.constant 0 : i32
    %c0_i32_0 = arith.constant 0 : i32
    %c0_i32_1 = arith.constant 0 : i32
    return %arg0, %c0_i32, %arg1, %c0_i32_0 : i32, i32, i32, i32
  }
  func.func @transform_4(%arg0: i32, %arg1: i32) -> (i32, i32, i32, i32) {
    %c0_i32 = arith.constant 0 : i32
    %c0_i32_0 = arith.constant 0 : i32
    %c0_i32_1 = arith.constant 0 : i32
    return %arg0, %c0_i32, %arg1, %c0_i32_0 : i32, i32, i32, i32
  }
  func.func @transform_5(%arg0: i32, %arg1: i32) -> (i32, i32, i32, i32) {
    %c0_i32 = arith.constant 0 : i32
    %c0_i32_0 = arith.constant 0 : i32
    %c0_i32_1 = arith.constant 0 : i32
    return %arg0, %c0_i32, %arg1, %c0_i32_0 : i32, i32, i32, i32
  }
  func.func @transform_6(%arg0: i32, %arg1: i32) -> (i32, i32, i32, i32) {
    %c0_i32 = arith.constant 0 : i32
    %c0_i32_0 = arith.constant 0 : i32
    %c0_i32_1 = arith.constant 0 : i32
    return %arg0, %arg1, %c0_i32, %c0_i32_0 : i32, i32, i32, i32
  }
}

</mosaic_0001>

<llo_original>
// kernel: tpu_custom_call.1
$region0: #{tpu_custom_call.1}
  #allocation0 [shape = 'u32[]', space=smem, size = 0x4, offset = 0x4, fixed_abs, tag = 'smem constant byte address 0x4 - core index']
  #allocation1 [shape = 'u32[72,128]{1,0:T(1,128)}', space=vmem, size = 0x9000, scoped, tag = 'internal scratch']
  %s0 = inlined_call_operand.hbm [shape: f32[2,2,128], index: 0, kind: input, shape index: {}]
  %s1 = inlined_call_operand.hbm [shape: f32[2,2,128], index: 1, kind: input, shape index: {}]
  %s2 = inlined_call_operand.hbm [shape: f32[2,2,128], index: 2, kind: input, shape index: {}]
  %s3 = inlined_call_operand.hbm [shape: f32[2,3,2,128], index: 3, kind: input, shape index: {}]
  %s4 = inlined_call_operand.hbm [shape: f32[2,3,2,128], index: 4, kind: input, shape index: {}]
  %s5 = inlined_call_operand.hbm [shape: f32[2,3,2,128], index: 5, kind: input, shape index: {}]
  %s6 = inlined_call_operand.hbm [shape: f32[2,1,8,128], index: 6, kind: output, shape index: {}]
  %s7 = sld [smem:[#allocation0]]
  $region81: #{tpu_custom_call.1} parent=0
    _
  %s9 = ssub.s32 1, %s7
  %s10 = scalar_select 0, %s9, %s7
  $region1: #{tpu_custom_call.1} parent=0
    #allocation2 [shape = 'u8[2048]{0}', space=vmem, size = 0x800, scoped, tag = 'input window, operand 0']
    #allocation3 [shape = 's32[2]{0}', space=sflag, size = 0x8, scoped, tag = 'scoped memory for tpu_custom_call.1']
    #allocation4 [shape = 's32[2]{0}', space=sflag, size = 0x8, scoped, tag = 'scoped memory for tpu_custom_call.1']
    #allocation5 [shape = 'u8[2048]{0}', space=vmem, size = 0x800, scoped, tag = 'input window, operand 1']
    #allocation6 [shape = 's32[2]{0}', space=sflag, size = 0x8, scoped, tag = 'scoped memory for tpu_custom_call.1']
    #allocation7 [shape = 'u8[2048]{0}', space=vmem, size = 0x800, scoped, tag = 'input window, operand 2']
    #allocation8 [shape = 'u8[6144]{0}', space=vmem, size = 0x1800, scoped, tag = 'input window, operand 3']
    #allocation9 [shape = 's32[2]{0}', space=sflag, size = 0x8, scoped, tag = 'scoped memory for tpu_custom_call.1']
    #allocation10 [shape = 'u8[6144]{0}', space=vmem, size = 0x1800, scoped, tag = 'input window, operand 4']
    #allocation11 [shape = 'u8[6144]{0}', space=vmem, size = 0x1800, scoped, tag = 'input window, operand 5']
    #allocation12 [shape = 's32[2]{0}', space=sflag, size = 0x8, scoped, tag = 'scoped memory for tpu_custom_call.1']
    #allocation13 [shape = 'u8[8192]{0}', space=vmem, size = 0x2000, scoped, tag = 'output window, operand 0']
    %11 = vsyncpa [#allocation3], 0
    %s12 = scalar_lea.sflag [#allocation3], 1
    %13 = vsyncpa %s12, 0
    %14 = vsyncpa [#allocation6], 0
    %s15 = scalar_lea.sflag [#allocation6], 1
    %16 = vsyncpa %s15, 0
    %17 = vsyncpa [#allocation9], 0
    %s18 = scalar_lea.sflag [#allocation9], 1
    %19 = vsyncpa %s18, 0
    %20 = vsyncpa [#allocation12], 0
    %s21 = scalar_lea.sflag [#allocation12], 1
    %22 = vsyncpa %s21, 0
    %23 = vsyncpa [#allocation4], 0
    %s24 = scalar_lea.sflag [#allocation4], 1
    %25 = vsyncpa %s24, 0
    loop: start=0, step=1, limit=4
    $region2: #{tpu_custom_call.1} parent=1 // loop_pre_header
      _
    $region3: #{tpu_custom_call.1} parent=1 // loop_header
      %s27 = sphi 0, %s31
      %p28 = scmp.ge.s32.totalorder %s27, 4
      %s34 = sphi 0, %s46
      %s35 = sphi 0, %s42
      %s36 = sphi 0, %s34
      %s37 = sphi 0, %s35
      %s38 = sphi 0, %s36
      %s39 = sphi 0, %s37
      %s51 = sphi 0, %s53
      %s54 = sphi 0, %s51
      %s55 = sphi 0, %s54
      %s71 = sphi 0, %s55
      %s79 = sphi 0, %s81
      %s82 = sphi 0, %s79
      %s83 = sphi 0, %s82
      %s99 = sphi 0, %s83
      %s107 = sphi 0, %s109
      %s110 = sphi 0, %s107
      %s111 = sphi 0, %s110
      %s127 = sphi 0, %s111
      %s135 = sphi 0, %s137
      %s138 = sphi 0, %s135
      %s139 = sphi 0, %s138
      %s155 = sphi 0, %s139
      %s163 = sphi 0, %s165
      %s166 = sphi 0, %s163
      %s167 = sphi 0, %s166
      %s183 = sphi 0, %s167
      %s191 = sphi 0, %s193
      %s194 = sphi 0, %s191
      %s195 = sphi 0, %s194
      %s211 = sphi 0, %s195
      %s219 = sphi 0, %s221
      %s222 = sphi 0, %s219
      %s223 = sphi 0, %s222
      %s239 = sphi 0, %s223
    $region4: #{tpu_custom_call.1} parent=1 // loop_header_branch
      %30 = sbr.rel (%p28) target = $region8
    $region5: #{tpu_custom_call.1} parent=1 // loop_body
      %s32 = ssub.s32 %s27, 1
      %s33 = ssub.s32 %s27, 2
      %s40 = sadd.s32 1, %s35
      %p41 = scmp.ge.s32.totalorder %s40, 1
      %s42 = scalar_select %p41, 0, %s40
      %s43 = sadd.s32 1, %s34
      %s44 = scalar_select %p41, %s43, %s34
      %p45 = scmp.ge.s32.totalorder %s44, 2
      %s46 = scalar_select %p45, 0, %s44
      %s47 = ssub.s32 %s34, %s46
      %s48 = ssub.s32 %s35, %s42
      %s49 = sor.u32 %s47, %s48
      %p50 = scmp.eq.s32.totalorder %s49, 0
      %s52 = sadd.s32 %s51, 1
      %s53 = scalar_select %p50, %s51, %s52
      %p56 = pneg %p50
      %p57 = scmp.eq.s32.totalorder %s27, 1
      %p58 = por %p56, %p57
      %p59 = scmp.ne.s32.totalorder %s51, %s54
      %p60 = scmp.eq.s32.totalorder %s27, 0
      %p61 = por %p59, %p60
      %p62 = scmp.ne.s32.totalorder %s51, %s54
      %p63 = scmp.eq.s32.totalorder %s32, 1
      %p64 = por %p62, %p63
      %p65 = scmp.ne.s32.totalorder %s54, %s55
      %p66 = scmp.eq.s32.totalorder %s32, 0
      %p67 = por %p65, %p66
      %p68 = scmp.ne.s32.totalorder %s54, %s55
      %p69 = scmp.eq.s32.totalorder %s33, 1
      %p70 = por %p68, %p69
      %p72 = scmp.ne.s32.totalorder %s55, %s71
      %p73 = scmp.eq.s32.totalorder %s33, 0
      %p74 = por %p72, %p73
      %s75 = ssub.s32 %s34, %s46
      %s76 = ssub.s32 %s35, %s42
      %s77 = sor.u32 %s75, %s76
      %p78 = scmp.eq.s32.totalorder %s77, 0
      %s80 = sadd.s32 %s79, 1
      %s81 = scalar_select %p78, %s79, %s80
      %p84 = pneg %p78
      %p85 = scmp.eq.s32.totalorder %s27, 1
      %p86 = por %p84, %p85
      %p87 = scmp.ne.s32.totalorder %s79, %s82
      %p88 = scmp.eq.s32.totalorder %s27, 0
      %p89 = por %p87, %p88
      %p90 = scmp.ne.s32.totalorder %s79, %s82
      %p91 = scmp.eq.s32.totalorder %s32, 1
      %p92 = por %p90, %p91
      %p93 = scmp.ne.s32.totalorder %s82, %s83
      %p94 = scmp.eq.s32.totalorder %s32, 0
      %p95 = por %p93, %p94
      %p96 = scmp.ne.s32.totalorder %s82, %s83
      %p97 = scmp.eq.s32.totalorder %s33, 1
      %p98 = por %p96, %p97
      %p100 = scmp.ne.s32.totalorder %s83, %s99
      %p101 = scmp.eq.s32.totalorder %s33, 0
      %p102 = por %p100, %p101
      %s103 = ssub.s32 %s34, %s46
      %s104 = ssub.s32 %s35, %s42
      %s105 = sor.u32 %s103, %s104
      %p106 = scmp.eq.s32.totalorder %s105, 0
      %s108 = sadd.s32 %s107, 1
      %s109 = scalar_select %p106, %s107, %s108
      %p112 = pneg %p106
      %p113 = scmp.eq.s32.totalorder %s27, 1
      %p114 = por %p112, %p113
      %p115 = scmp.ne.s32.totalorder %s107, %s110
      %p116 = scmp.eq.s32.totalorder %s27, 0
      %p117 = por %p115, %p116
      %p118 = scmp.ne.s32.totalorder %s107, %s110
      %p119 = scmp.eq.s32.totalorder %s32, 1
      %p120 = por %p118, %p119
      %p121 = scmp.ne.s32.totalorder %s110, %s111
      %p122 = scmp.eq.s32.totalorder %s32, 0
      %p123 = por %p121, %p122
      %p124 = scmp.ne.s32.totalorder %s110, %s111
      %p125 = scmp.eq.s32.totalorder %s33, 1
      %p126 = por %p124, %p125
      %p128 = scmp.ne.s32.totalorder %s111, %s127
      %p129 = scmp.eq.s32.totalorder %s33, 0
      %p130 = por %p128, %p129
      %s131 = ssub.s32 %s34, %s46
      %s132 = ssub.s32 %s35, %s42
      %s133 = sor.u32 %s131, %s132
      %p134 = scmp.eq.s32.totalorder %s133, 0
      %s136 = sadd.s32 %s135, 1
      %s137 = scalar_select %p134, %s135, %s136
      %p140 = pneg %p134
      %p141 = scmp.eq.s32.totalorder %s27, 1
      %p142 = por %p140, %p141
      %p143 = scmp.ne.s32.totalorder %s135, %s138
      %p144 = scmp.eq.s32.totalorder %s27, 0
      %p145 = por %p143, %p144
      %p146 = scmp.ne.s32.totalorder %s135, %s138
      %p147 = scmp.eq.s32.totalorder %s32, 1
      %p148 = por %p146, %p147
      %p149 = scmp.ne.s32.totalorder %s138, %s139
      %p150 = scmp.eq.s32.totalorder %s32, 0
      %p151 = por %p149, %p150
      %p152 = scmp.ne.s32.totalorder %s138, %s139
      %p153 = scmp.eq.s32.totalorder %s33, 1
      %p154 = por %p152, %p153
      %p156 = scmp.ne.s32.totalorder %s139, %s155
      %p157 = scmp.eq.s32.totalorder %s33, 0
      %p158 = por %p156, %p157
      %s159 = ssub.s32 %s34, %s46
      %s160 = ssub.s32 %s35, %s42
      %s161 = sor.u32 %s159, %s160
      %p162 = scmp.eq.s32.totalorder %s161, 0
      %s164 = sadd.s32 %s163, 1
      %s165 = scalar_select %p162, %s163, %s164
      %p168 = pneg %p162
      %p169 = scmp.eq.s32.totalorder %s27, 1
      %p170 = por %p168, %p169
      %p171 = scmp.ne.s32.totalorder %s163, %s166
      %p172 = scmp.eq.s32.totalorder %s27, 0
      %p173 = por %p171, %p172
      %p174 = scmp.ne.s32.totalorder %s163, %s166
      %p175 = scmp.eq.s32.totalorder %s32, 1
      %p176 = por %p174, %p175
      %p177 = scmp.ne.s32.totalorder %s166, %s167
      %p178 = scmp.eq.s32.totalorder %s32, 0
      %p179 = por %p177, %p178
      %p180 = scmp.ne.s32.totalorder %s166, %s167
      %p181 = scmp.eq.s32.totalorder %s33, 1
      %p182 = por %p180, %p181
      %p184 = scmp.ne.s32.totalorder %s167, %s183
      %p185 = scmp.eq.s32.totalorder %s33, 0
      %p186 = por %p184, %p185
      %s187 = ssub.s32 %s34, %s46
      %s188 = ssub.s32 %s35, %s42
      %s189 = sor.u32 %s187, %s188
      %p190 = scmp.eq.s32.totalorder %s189, 0
      %s192 = sadd.s32 %s191, 1
      %s193 = scalar_select %p190, %s191, %s192
      %p196 = pneg %p190
      %p197 = scmp.eq.s32.totalorder %s27, 1
      %p198 = por %p196, %p197
      %p199 = scmp.ne.s32.totalorder %s191, %s194
      %p200 = scmp.eq.s32.totalorder %s27, 0
      %p201 = por %p199, %p200
      %p202 = scmp.ne.s32.totalorder %s191, %s194
      %p203 = scmp.eq.s32.totalorder %s32, 1
      %p204 = por %p202, %p203
      %p205 = scmp.ne.s32.totalorder %s194, %s195
      %p206 = scmp.eq.s32.totalorder %s32, 0
      %p207 = por %p205, %p206
      %p208 = scmp.ne.s32.totalorder %s194, %s195
      %p209 = scmp.eq.s32.totalorder %s33, 1
      %p210 = por %p208, %p209
      %p212 = scmp.ne.s32.totalorder %s195, %s211
      %p213 = scmp.eq.s32.totalorder %s33, 0
      %p214 = por %p212, %p213
      %s215 = ssub.s32 %s34, %s46
      %s216 = ssub.s32 %s35, %s42
      %s217 = sor.u32 %s215, %s216
      %p218 = scmp.eq.s32.totalorder %s217, 0
      %s220 = sadd.s32 %s219, 1
      %s221 = scalar_select %p218, %s219, %s220
      %p224 = pneg %p218
      %p225 = scmp.eq.s32.totalorder %s27, 1
      %p226 = por %p224, %p225
      %p227 = scmp.ne.s32.totalorder %s219, %s222
      %p228 = scmp.eq.s32.totalorder %s27, 0
      %p229 = por %p227, %p228
      %p230 = scmp.ne.s32.totalorder %s219, %s222
      %p231 = scmp.eq.s32.totalorder %s32, 1
      %p232 = por %p230, %p231
      %p233 = scmp.ne.s32.totalorder %s222, %s223
      %p234 = scmp.eq.s32.totalorder %s32, 0
      %p235 = por %p233, %p234
      %p236 = scmp.ne.s32.totalorder %s222, %s223
      %p237 = scmp.eq.s32.totalorder %s33, 1
      %p238 = por %p236, %p237
      %p240 = scmp.ne.s32.totalorder %s223, %s239
      %p241 = scmp.eq.s32.totalorder %s33, 0
      %p242 = por %p240, %p241
      %p243 = scmp.le.s32.totalorder 1, %s27
      %p244 = scmp.lt.s32.totalorder %s27, 3
      %p245 = pnand %p243, %p244
      %p246 = pneg %p245
      // Predicated region
      $region9: #{tpu_custom_call.1} parent=5 // pred_check
        _
      $region10: #{tpu_custom_call.1} parent=5 // pred_check_branch
        %248 = sbr.rel (%p245) target = $region12
      $region11: #{tpu_custom_call.1} parent=5 // pred_region
        %s249 = ssub.s32 %s27, 1
      $region12: #{tpu_custom_call.1} parent=5 // pred_fallthru
        _
      %p250 = scmp.lt.s32.totalorder %s27, 2
      // Predicated region
      $region13: #{tpu_custom_call.1} parent=5 // pred_check
        %p251 = pneg %p250
      $region14: #{tpu_custom_call.1} parent=5 // pred_check_branch
        %253 = sbr.rel (%p251) target = $region16
      $region15: #{tpu_custom_call.1} parent=5 // pred_region
        // Predicated region
        $region17: #{tpu_custom_call.1} parent=15 // pred_check
          %p254 = pneg %p61
        $region18: #{tpu_custom_call.1} parent=15 // pred_check_branch
          %256 = sbr.rel (%p254) target = $region20
        $region19: #{tpu_custom_call.1} parent=15 // pred_region
          %s257 = sand.u32 %s51, 1
          %s258 = scalar_lea.sflag [#allocation3], %s257
          %s259 = sand.u32 %s51, 1
          %s260 = smul.addr %s259, 2
          %s261 = scalar_lea.vmem [#allocation2], %s260
          %263 = vsyncadd %s258, 0
          %s264 = sadd.s32 %s35, %s34
          %s265 = smul.addr %s264, 2
          %s266 = scalar_lea.hbm %s0, %s265
          %s268 = sshll.u32 %s266, 4
          %s269 = int_to_ptr.hbm [resolvable:$true] %s268
          %s270 = sshll.u32 %s261, 4
          %s271 = int_to_ptr.vmem [resolvable:$true] %s270
          %273 = dma.hbm_to_vmem [thread:$0]  %s269, 32, %s271, %s258
        $region20: #{tpu_custom_call.1} parent=15 // pred_fallthru
          _
        // Predicated region
        $region21: #{tpu_custom_call.1} parent=15 // pred_check
          %p274 = pneg %p89
        $region22: #{tpu_custom_call.1} parent=15 // pred_check_branch
          %276 = sbr.rel (%p274) target = $region24
        $region23: #{tpu_custom_call.1} parent=15 // pred_region
          %s277 = sand.u32 %s27, 1
          %s278 = scalar_lea.sflag [#allocation6], %s277
          %s279 = sand.u32 %s79, 1
          %s280 = smul.addr %s279, 2
          %s281 = scalar_lea.vmem [#allocation5], %s280
          %283 = vsyncadd %s278, 0
          %s284 = sadd.s32 %s35, %s34
          %s285 = smul.addr %s284, 2
          %s286 = scalar_lea.hbm %s1, %s285
          %s288 = sshll.u32 %s286, 4
          %s289 = int_to_ptr.hbm [resolvable:$true] %s288
          %s290 = sshll.u32 %s281, 4
          %s291 = int_to_ptr.vmem [resolvable:$true] %s290
          %293 = dma.hbm_to_vmem [thread:$0]  %s289, 32, %s291, %s278
        $region24: #{tpu_custom_call.1} parent=15 // pred_fallthru
          _
        // Predicated region
        $region25: #{tpu_custom_call.1} parent=15 // pred_check
          %p294 = pneg %p117
        $region26: #{tpu_custom_call.1} parent=15 // pred_check_branch
          %296 = sbr.rel (%p294) target = $region28
        $region27: #{tpu_custom_call.1} parent=15 // pred_region
          %s297 = sand.u32 %s27, 1
          %s298 = scalar_lea.sflag [#allocation6], %s297
          %s299 = sand.u32 %s107, 1
          %s300 = smul.addr %s299, 2
          %s301 = scalar_lea.vmem [#allocation7], %s300
          %303 = vsyncadd %s298, 0
          %s304 = sadd.s32 %s35, %s34
          %s305 = smul.addr %s304, 2
          %s306 = scalar_lea.hbm %s2, %s305
          %s308 = sshll.u32 %s306, 4
          %s309 = int_to_ptr.hbm [resolvable:$true] %s308
          %s310 = sshll.u32 %s301, 4
          %s311 = int_to_ptr.vmem [resolvable:$true] %s310
          %313 = dma.hbm_to_vmem [thread:$0]  %s309, 32, %s311, %s298
        $region28: #{tpu_custom_call.1} parent=15 // pred_fallthru
          _
        // Predicated region
        $region29: #{tpu_custom_call.1} parent=15 // pred_check
          %p314 = pneg %p145
        $region30: #{tpu_custom_call.1} parent=15 // pred_check_branch
          %316 = sbr.rel (%p314) target = $region32
        $region31: #{tpu_custom_call.1} parent=15 // pred_region
          %s317 = sand.u32 %s27, 1
          %s318 = scalar_lea.sflag [#allocation9], %s317
          %s319 = sand.u32 %s135, 1
          %s320 = smul.addr %s319, 6
          %s321 = scalar_lea.vmem [#allocation8], %s320
          %323 = vsyncadd %s318, 0
          %s324 = smul.addr %s34, 3
          %s325 = sadd.s32 %s35, %s324
          %s326 = smul.addr %s325, 2
          %s327 = scalar_lea.hbm %s3, %s326
          %s328 = sshll.u32 %s327, 4
          %s329 = int_to_ptr.hbm [resolvable:$true] %s328
          %s330 = sshll.u32 %s321, 4
          %s331 = int_to_ptr.vmem [resolvable:$true] %s330
          %336 = dma.hbm_to_vmem [thread:$0]  %s329, 96, %s331, %s318, 32, 32, 2
        $region32: #{tpu_custom_call.1} parent=15 // pred_fallthru
          _
        // Predicated region
        $region33: #{tpu_custom_call.1} parent=15 // pred_check
          %p337 = pneg %p173
        $region34: #{tpu_custom_call.1} parent=15 // pred_check_branch
          %339 = sbr.rel (%p337) target = $region36
        $region35: #{tpu_custom_call.1} parent=15 // pred_region
          %s340 = sand.u32 %s27, 1
          %s341 = scalar_lea.sflag [#allocation9], %s340
          %s342 = sand.u32 %s163, 1
          %s343 = smul.addr %s342, 6
          %s344 = scalar_lea.vmem [#allocation10], %s343
          %346 = vsyncadd %s341, 0
          %s347 = smul.addr %s34, 3
          %s348 = sadd.s32 %s35, %s347
          %s349 = smul.addr %s348, 2
          %s350 = scalar_lea.hbm %s4, %s349
          %s351 = sshll.u32 %s350, 4
          %s352 = int_to_ptr.hbm [resolvable:$true] %s351
          %s353 = sshll.u32 %s344, 4
          %s354 = int_to_ptr.vmem [resolvable:$true] %s353
          %359 = dma.hbm_to_vmem [thread:$0]  %s352, 96, %s354, %s341, 32, 32, 2
        $region36: #{tpu_custom_call.1} parent=15 // pred_fallthru
          _
        // Predicated region
        $region37: #{tpu_custom_call.1} parent=15 // pred_check
          %p360 = pneg %p201
        $region38: #{tpu_custom_call.1} parent=15 // pred_check_branch
          %362 = sbr.rel (%p360) target = $region40
        $region39: #{tpu_custom_call.1} parent=15 // pred_region
          %s363 = sand.u32 %s191, 1
          %s364 = scalar_lea.sflag [#allocation12], %s363
          %s365 = sand.u32 %s191, 1
          %s366 = smul.addr %s365, 6
          %s367 = scalar_lea.vmem [#allocation11], %s366
          %369 = vsyncadd %s364, 0
          %s370 = smul.addr %s34, 3
          %s371 = sadd.s32 %s35, %s370
          %s372 = smul.addr %s371, 2
          %s373 = scalar_lea.hbm %s5, %s372
          %s374 = sshll.u32 %s373, 4
          %s375 = int_to_ptr.hbm [resolvable:$true] %s374
          %s376 = sshll.u32 %s367, 4
          %s377 = int_to_ptr.vmem [resolvable:$true] %s376
          %382 = dma.hbm_to_vmem [thread:$0]  %s375, 96, %s377, %s364, 32, 32, 2
        $region40: #{tpu_custom_call.1} parent=15 // pred_fallthru
          _
      $region16: #{tpu_custom_call.1} parent=5 // pred_fallthru
        _
      %p383 = scmp.le.s32.totalorder 1, %s27
      %p384 = scmp.lt.s32.totalorder %s27, 3
      %p385 = pnand %p383, %p384
      %p386 = pneg %p385
      // Predicated region
      $region41: #{tpu_custom_call.1} parent=5 // pred_check
        _
      $region42: #{tpu_custom_call.1} parent=5 // pred_check_branch
        %388 = sbr.rel (%p385) target = $region44
      $region43: #{tpu_custom_call.1} parent=5 // pred_region
        %s389 = ssub.s32 %s27, 1
        %s390 = sand.u32 %s54, 1
        %s391 = scalar_lea.sflag [#allocation3], %s390
        %s392 = sand.u32 %s54, 1
        %s393 = smul.addr %s392, 2
        %s394 = scalar_lea.vmem [#allocation2], %s393
        // Predicated region
        $region45: #{tpu_custom_call.1} parent=43 // pred_check
          %p395 = pneg %p67
        $region46: #{tpu_custom_call.1} parent=43 // pred_check_branch
          %397 = sbr.rel (%p395) target = $region48
        $region47: #{tpu_custom_call.1} parent=43 // pred_region
          %399 = dma.done %s391, 32
        $region48: #{tpu_custom_call.1} parent=43 // pred_fallthru
          _
        %s400 = sand.u32 %s32, 1
        %s401 = scalar_lea.sflag [#allocation6], %s400
        %s402 = sand.u32 %s82, 1
        %s403 = smul.addr %s402, 2
        %s404 = scalar_lea.vmem [#allocation5], %s403
        // Predicated region
        $region49: #{tpu_custom_call.1} parent=43 // pred_check
          %p405 = pneg %p95
        $region50: #{tpu_custom_call.1} parent=43 // pred_check_branch
          %407 = sbr.rel (%p405) target = $region52
        $region51: #{tpu_custom_call.1} parent=43 // pred_region
          %409 = dma.done %s401, 32
        $region52: #{tpu_custom_call.1} parent=43 // pred_fallthru
          _
        %s410 = sand.u32 %s32, 1
        %s411 = scalar_lea.sflag [#allocation6], %s410
        %s412 = sand.u32 %s110, 1
        %s413 = smul.addr %s412, 2
        %s414 = scalar_lea.vmem [#allocation7], %s413
        // Predicated region
        $region53: #{tpu_custom_call.1} parent=43 // pred_check
          %p415 = pneg %p123
        $region54: #{tpu_custom_call.1} parent=43 // pred_check_branch
          %417 = sbr.rel (%p415) target = $region56
        $region55: #{tpu_custom_call.1} parent=43 // pred_region
          %419 = dma.done %s411, 32
        $region56: #{tpu_custom_call.1} parent=43 // pred_fallthru
          _
        %s420 = sand.u32 %s32, 1
        %s421 = scalar_lea.sflag [#allocation9], %s420
        %s422 = sand.u32 %s138, 1
        %s423 = smul.addr %s422, 6
        %s424 = scalar_lea.vmem [#allocation8], %s423
        // Predicated region
        $region57: #{tpu_custom_call.1} parent=43 // pred_check
          %p425 = pneg %p151
        $region58: #{tpu_custom_call.1} parent=43 // pred_check_branch
          %427 = sbr.rel (%p425) target = $region60
        $region59: #{tpu_custom_call.1} parent=43 // pred_region
          %429 = dma.done %s421, 96
        $region60: #{tpu_custom_call.1} parent=43 // pred_fallthru
          _
        %s430 = sand.u32 %s32, 1
        %s431 = scalar_lea.sflag [#allocation9], %s430
        %s432 = sand.u32 %s166, 1
        %s433 = smul.addr %s432, 6
        %s434 = scalar_lea.vmem [#allocation10], %s433
        // Predicated region
        $region61: #{tpu_custom_call.1} parent=43 // pred_check
          %p435 = pneg %p179
        $region62: #{tpu_custom_call.1} parent=43 // pred_check_branch
          %437 = sbr.rel (%p435) target = $region64
        $region63: #{tpu_custom_call.1} parent=43 // pred_region
          %439 = dma.done %s431, 96
        $region64: #{tpu_custom_call.1} parent=43 // pred_fallthru
          _
        %s440 = sand.u32 %s194, 1
        %s441 = scalar_lea.sflag [#allocation12], %s440
        %s442 = sand.u32 %s194, 1
        %s443 = smul.addr %s442, 6
        %s444 = scalar_lea.vmem [#allocation11], %s443
        // Predicated region
        $region65: #{tpu_custom_call.1} parent=43 // pred_check
          %p445 = pneg %p207
        $region66: #{tpu_custom_call.1} parent=43 // pred_check_branch
          %447 = sbr.rel (%p445) target = $region68
        $region67: #{tpu_custom_call.1} parent=43 // pred_region
          %449 = dma.done %s441, 96
        $region68: #{tpu_custom_call.1} parent=43 // pred_fallthru
          _
        %s450 = sand.u32 %s54, 1
        %s451 = scalar_lea.sflag [#allocation3], %s450
        %s452 = sand.u32 %s54, 1
        %s453 = smul.addr %s452, 2
        %s454 = scalar_lea.vmem [#allocation2], %s453
        %p455 = pneg %p67
        %p456 = pneg %p64
        %s457 = sand.u32 %s32, 1
        %s458 = scalar_lea.sflag [#allocation6], %s457
        %s459 = sand.u32 %s82, 1
        %s460 = smul.addr %s459, 2
        %s461 = scalar_lea.vmem [#allocation5], %s460
        %p462 = pneg %p95
        %p463 = pneg %p92
        %s464 = sand.u32 %s32, 1
        %s465 = scalar_lea.sflag [#allocation6], %s464
        %s466 = sand.u32 %s110, 1
        %s467 = smul.addr %s466, 2
        %s468 = scalar_lea.vmem [#allocation7], %s467
        %p469 = pneg %p123
        %p470 = pneg %p120
        %s471 = sand.u32 %s32, 1
        %s472 = scalar_lea.sflag [#allocation9], %s471
        %s473 = sand.u32 %s138, 1
        %s474 = smul.addr %s473, 6
        %s475 = scalar_lea.vmem [#allocation8], %s474
        %p476 = pneg %p151
        %p477 = pneg %p148
        %s478 = sand.u32 %s32, 1
        %s479 = scalar_lea.sflag [#allocation9], %s478
        %s480 = sand.u32 %s166, 1
        %s481 = smul.addr %s480, 6
        %s482 = scalar_lea.vmem [#allocation10], %s481
        %p483 = pneg %p179
        %p484 = pneg %p176
        %s485 = sand.u32 %s194, 1
        %s486 = scalar_lea.sflag [#allocation12], %s485
        %s487 = sand.u32 %s194, 1
        %s488 = smul.addr %s487, 6
        %s489 = scalar_lea.vmem [#allocation11], %s488
        %p490 = pneg %p207
        %p491 = pneg %p204
        %p492 = pneg %p235
        %p493 = pneg %p232
        %s494 = sand.u32 %s222, 1
        %s495 = scalar_lea.sflag [#allocation4], %s494
        %s496 = sand.u32 %s222, 1
        %s497 = smul.addr %s496, 8
        %s498 = scalar_lea.vmem [#allocation13], %s497
        %v499 = vld [vmem:[%s394] sm:$0x3]
        %v500 = vld [vmem:[%s424] sm:$0x3]
        %v501 = vld [vmem:[%s424 + $0x2] sm:$0x3]
        %v502 = vld [vmem:[%s424 + $0x4] sm:$0x3]
        %v503 = vmul.f32 %v500, 0.299
        %v504 = vmul.f32 %v501, 0.587
        %v505 = vadd.f32 %v503, %v504
        %v506 = vmul.f32 %v502, 0.114
        %v507 = vadd.f32 %v505, %v506
        %v508 = vmul.f32 %v499, 1.5
        %v509 = vmul.f32 %v508, 1.442695
        %v510 = vpow.pop %v509
        %v511 = vsub.f32 %v510, 2.0
        %v512 = vmul.f32 %v507, 1.5
        %v513 = vmul.f32 %v512, 1.442695
        %v514 = vpow.pop %v513
        %v515 = vsub.f32 %v514, 2.0
        %v516 = vmul.f32 %v511, %v515
        %v517 = vadd.f32 %v516, 1.0
        %v518 = vmax.f32 %v517, 0.0
        %v519 = vmin.f32 %v518, 5.0
        %v520 = vsub.f32 %v519, %v499
        %v521 = vadd.f32 %v520, 0.0
        %vm522 = vcmask 1041408
        %v523 = vsel %vm522, %v521, 0.0
        %v524 = vrot.slane %v523, 4
        %v525 = vadd.f32 %v523, %v524
        %v526 = vrot.slane %v525, 2
        %v527 = vadd.f32 %v525, %v526
        %v528 = vrot.slane %v527, 1
        %v529 = vadd.f32 %v527, %v528
        %v530 = vlaneseq
        %v531 = vshrl.u32 %v530, 7
        %vm532 = vcmp.eq.s32.totalorder %v531, 0
        %v533 = vsel %vm532, %v529, 0.0
        %v534 = vadd.f32 %v533, 0.0
        %v535 = vld [vmem:[%s404] sm:$0x3]
        %v536 = vld [vmem:[%s434] sm:$0x3]
        %v537 = vld [vmem:[%s434 + $0x2] sm:$0x3]
        %v538 = vld [vmem:[%s434 + $0x4] sm:$0x3]
        %v539 = vmul.f32 %v536, 0.299
        %v540 = vmul.f32 %v537, 0.587
        %v541 = vadd.f32 %v539, %v540
        %v542 = vmul.f32 %v538, 0.114
        %v543 = vadd.f32 %v541, %v542
        %v544 = vmul.f32 %v535, 1.5
        %v545 = vmul.f32 %v544, 1.442695
        %v546 = vpow.pop %v545
        %v547 = vsub.f32 %v546, 2.0
        %v548 = vmul.f32 %v543, 1.5
        %v549 = vmul.f32 %v548, 1.442695
        %v550 = vpow.pop %v549
        %v551 = vsub.f32 %v550, 2.0
        %v552 = vmul.f32 %v547, %v551
        %v553 = vadd.f32 %v552, 1.0
        %v554 = vmax.f32 %v553, 0.0
        %v555 = vmin.f32 %v554, 5.0
        %v556 = vsub.f32 %v555, %v535
        %v557 = vadd.f32 %v556, 0.0
        %v558 = vsel %vm522, %v557, 0.0
        %v559 = vrot.slane %v558, 4
        %v560 = vadd.f32 %v558, %v559
        %v561 = vrot.slane %v560, 2
        %v562 = vadd.f32 %v560, %v561
        %v563 = vrot.slane %v562, 1
        %v564 = vadd.f32 %v562, %v563
        %v565 = vsel %vm532, %v564, 0.0
        %v566 = vadd.f32 %v534, %v565
        %v567 = vsub.f32 %v500, %v536
        %v568 = vsub.f32 %v501, %v537
        %v569 = vsub.f32 %v502, %v538
        %v570 = vmul.f32 %v567, %v567
        %v571 = vmul.f32 %v568, %v568
        %v572 = vadd.f32 %v570, %v571
        %v573 = vmul.f32 %v569, %v569
        %v574 = vadd.f32 %v572, %v573
        %v575 = vadd.f32 %v574, 0.0
        %v576 = vsel %vm522, %v575, 0.0
        %v577 = vrot.slane %v576, 4
        %v578 = vadd.f32 %v576, %v577
        %v579 = vrot.slane %v578, 2
        %v580 = vadd.f32 %v578, %v579
        %v581 = vrot.slane %v580, 1
        %v582 = vadd.f32 %v580, %v581
        %v583 = vsel %vm532, %v582, 0.0
        %v584 = vadd.f32 %v583, 0.0
        %v585 = vld [vmem:[%s414] sm:$0x3]
        %v586 = vld [vmem:[%s444] sm:$0x3]
        %v587 = vld [vmem:[%s444 + $0x2] sm:$0x3]
        %v588 = vld [vmem:[%s444 + $0x4] sm:$0x3]
        %v589 = vmul.f32 %v586, 0.299
        %v590 = vmul.f32 %v587, 0.587
        %v591 = vadd.f32 %v589, %v590
        %v592 = vmul.f32 %v588, 0.114
        %v593 = vadd.f32 %v591, %v592
        %v594 = vmul.f32 %v585, 1.5
        %v595 = vmul.f32 %v594, 1.442695
        %v596 = vpow.pop %v595
        %v597 = vsub.f32 %v596, 2.0
        %v598 = vmul.f32 %v593, 1.5
        %v599 = vmul.f32 %v598, 1.442695
        %v600 = vpow.pop %v599
        %v601 = vsub.f32 %v600, 2.0
        %v602 = vmul.f32 %v597, %v601
        %v603 = vadd.f32 %v602, 1.0
        %v604 = vmax.f32 %v603, 0.0
        %v605 = vmin.f32 %v604, 5.0
        %v606 = vsub.f32 %v605, %v585
        %v607 = vadd.f32 %v606, 0.0
        %v608 = vsel %vm522, %v607, 0.0
        %v609 = vrot.slane %v608, 4
        %v610 = vadd.f32 %v608, %v609
        %v611 = vrot.slane %v610, 2
        %v612 = vadd.f32 %v610, %v611
        %v613 = vrot.slane %v612, 1
        %v614 = vadd.f32 %v612, %v613
        %v615 = vsel %vm532, %v614, 0.0
        %v616 = vadd.f32 %v566, %v615
        %v617 = vsub.f32 %v536, %v586
        %v618 = vsub.f32 %v537, %v587
        %v619 = vsub.f32 %v538, %v588
        %v620 = vmul.f32 %v617, %v617
        %v621 = vmul.f32 %v618, %v618
        %v622 = vadd.f32 %v620, %v621
        %v623 = vmul.f32 %v619, %v619
        %v624 = vadd.f32 %v622, %v623
        %v625 = vadd.f32 %v624, 0.0
        %v626 = vsel %vm522, %v625, 0.0
        %v627 = vrot.slane %v626, 4
        %v628 = vadd.f32 %v626, %v627
        %v629 = vrot.slane %v628, 2
        %v630 = vadd.f32 %v628, %v629
        %v631 = vrot.slane %v630, 1
        %v632 = vadd.f32 %v630, %v631
        %v633 = vsel %vm532, %v632, 0.0
        %v634 = vadd.f32 %v584, %v633
        %v635 = vmul.f32 %v616, 0.000390625
        %v636 = vmul.f32 %v634, 0.0013020834
        %v637 = vadd.f32 %v635, %v636
        %638 = vst [vmem:[%s498] sm:$0xff] %v637
        %s639 = sand.u32 %s222, 1
        %s640 = scalar_lea.sflag [#allocation4], %s639
        %s641 = sand.u32 %s222, 1
        %s642 = smul.addr %s641, 8
        %s643 = scalar_lea.vmem [#allocation13], %s642
        // Predicated region
        $region69: #{tpu_custom_call.1} parent=43 // pred_check
          %p644 = pneg %p232
        $region70: #{tpu_custom_call.1} parent=43 // pred_check_branch
          %646 = sbr.rel (%p644) target = $region72
        $region71: #{tpu_custom_call.1} parent=43 // pred_region
          %648 = vsyncadd %s640, 0
          %s649 = sadd.s32 %s37, %s36
          %s650 = smul.addr %s649, 8
          %s651 = scalar_lea.hbm %s6, %s650
          %s653 = sshll.u32 %s643, 4
          %s654 = int_to_ptr.vmem [resolvable:$true] %s653
          %s655 = sshll.u32 %s651, 4
          %s656 = int_to_ptr.hbm [resolvable:$true] %s655
          %658 = dma.vmem_to_hbm [thread:$0]  %s654, 128, %s656, %s640
        $region72: #{tpu_custom_call.1} parent=43 // pred_fallthru
          _
      $region44: #{tpu_custom_call.1} parent=5 // pred_fallthru
        _
      %p659 = scmp.le.s32.totalorder 2, %s27
      // Predicated region
      $region73: #{tpu_custom_call.1} parent=5 // pred_check
        %p660 = pneg %p659
      $region74: #{tpu_custom_call.1} parent=5 // pred_check_branch
        %662 = sbr.rel (%p660) target = $region76
      $region75: #{tpu_custom_call.1} parent=5 // pred_region
        %s663 = ssub.s32 %s27, 2
        // Predicated region
        $region77: #{tpu_custom_call.1} parent=75 // pred_check
          %p664 = pneg %p238
        $region78: #{tpu_custom_call.1} parent=75 // pred_check_branch
          %666 = sbr.rel (%p664) target = $region80
        $region79: #{tpu_custom_call.1} parent=75 // pred_region
          %s667 = sand.u32 %s223, 1
          %s668 = scalar_lea.sflag [#allocation4], %s667
          %s669 = sand.u32 %s223, 1
          %s670 = smul.addr %s669, 8
          %s671 = scalar_lea.vmem [#allocation13], %s670
          %673 = dma.done %s668, 128
        $region80: #{tpu_custom_call.1} parent=75 // pred_fallthru
          _
      $region76: #{tpu_custom_call.1} parent=5 // pred_fallthru
        _
    $region6: #{tpu_custom_call.1} parent=1 // loop_footer
      %s31 = sadd.s32 1, %s27
    $region7: #{tpu_custom_call.1} parent=1 // loop_footer_branch
      %26 = sbr.rel target = $region3
    $region8: #{tpu_custom_call.1} parent=1 // loop_exit
      _
    %674 = vsyncpa [#allocation3], 1
    %s675 = scalar_lea.sflag [#allocation3], 1
    %676 = vsyncpa %s675, 1
    %677 = vsyncpa [#allocation6], 1
    %s678 = scalar_lea.sflag [#allocation6], 1
    %679 = vsyncpa %s678, 1
    %680 = vsyncpa [#allocation9], 1
    %s681 = scalar_lea.sflag [#allocation9], 1
    %682 = vsyncpa %s681, 1
    %683 = vsyncpa [#allocation12], 1
    %s684 = scalar_lea.sflag [#allocation12], 1
    %685 = vsyncpa %s684, 1
    %686 = vsyncpa [#allocation4], 1
    %s687 = scalar_lea.sflag [#allocation4], 1
    %688 = vsyncpa %s687, 1

</llo_original>
